<compile_context>
chip_gen: v7x
topology: tpu7x:2x2x1
jax: 0.10.0
libtpu: 0.0.40
codegen_flags: <defaults>
</compile_context>

<pallas_src>
import functools

import jax
import jax.numpy as jnp
from jax import lax
from jax.experimental import pallas as pl
from jax.experimental.pallas import tpu as pltpu

MARGIN = 0.2          # nn.Module __init__ default (deterministic, no weights)
_COS_EPS = 1e-8       # F.cosine_similarity eps
_VMEM_BUDGET = 40 << 20


def _round_up(x, m):
    return ((x + m - 1) // m) * m


def _vmem_estimate(tile_b, batch_b, d):
    # double-buffered inputs + fdT scratch + acc / slab temps, all f32
    return 4 * (2 * (tile_b * d + batch_b * d) + 6 * batch_b * tile_b) + (2 << 20)


def _triplet_loss_kernel(src_ref, tgt_ref, out_ref, fdt_ref, *,
                         margin, batch_b, tile_b, unroll):
    src = src_ref[...].astype(jnp.float32)                       # (tile_b, D) anchors of this tile
    tgt = tgt_ref[...].astype(jnp.float32)                       # (batch_b, D) full batch

    # ---- cosine distances, transposed domain: fdT[j, c] = clamp(1 - cos(src[c], tgt[j]), 0) ----
    # Normalize rows first (1/max(||x||, eps) == min(rsqrt(x.x), 1/eps)) -> matches
    # F.cosine_similarity's per-norm clamp, and no transposes are needed anywhere.
    inv_s = jnp.minimum(lax.rsqrt(jnp.sum(src * src, axis=-1, keepdims=True)), 1.0 / _COS_EPS)
    inv_t = jnp.minimum(lax.rsqrt(jnp.sum(tgt * tgt, axis=-1, keepdims=True)), 1.0 / _COS_EPS)
    cos_t = lax.dot_general(tgt * inv_t, src * inv_s, (((1,), (1,)), ((), ())),
                            preferred_element_type=jnp.float32)  # (batch_b, tile_b)
    fdt = jnp.maximum(1.0 - cos_t, 0.0)
    fdt_ref[...] = fdt                                           # scratch: per-k row reads below

    tile_start = pl.program_id(0) * tile_b

    # TODO(synk): external triplet_selection.{select_diverse_anchors,select_triplets_smartly}
    # is not provided, so only the distinct-index base mask is applied and the
    # label-distance path (whose sole consumer is that module) is omitted.

    # ---- S_all: fully unmasked sum over the negative index k (3 VPU ops/elem/k, no masks) ----
    fdm = fdt + margin                                           # loop-invariant minuend slab

    def body(k, acc):
        an = fdt_ref[pl.ds(k, 1), :]                             # (1, tile_b): fd[anchor, k]
        return acc + jnp.maximum(fdm - an, 0.0)

    acc = lax.fori_loop(0, batch_b, body,
                        jnp.zeros((batch_b, tile_b), jnp.float32), unroll=unroll)
    s_all = jnp.sum(acc, axis=0, keepdims=True)                  # (1, tile_b) per-anchor totals

    # ---- inclusion-exclusion: remove i==j, i==k, j==k terms (O(B*TILE_B) one-time work) ----
    row = lax.broadcasted_iota(jnp.int32, (batch_b, tile_b), 0)
    col = lax.broadcasted_iota(jnp.int32, (batch_b, tile_b), 1)
    gcol = col + tile_start                                      # global anchor index per column
    diag = jnp.sum(jnp.where(row == gcol, fdt, 0.0), axis=0, keepdims=True)   # fd[i, i]
    s_ij = jnp.sum(jnp.maximum(diag - fdt + margin, 0.0), axis=0, keepdims=True)
    s_ik = jnp.sum(jnp.maximum(fdt - diag + margin, 0.0), axis=0, keepdims=True)
    # j==k term = batch_b*margin per anchor; pairwise/triple overlaps add back 2*margin.
    per_anchor = s_all - s_ij - s_ik + (2.0 - batch_b) * margin  # (1, tile_b)

    # Mask padded anchor rows (src was zero-padded up to a multiple of tile_b).
    valid = (lax.broadcasted_iota(jnp.int32, (1, tile_b), 1) + tile_start) < batch_b
    partial = jnp.sum(jnp.where(valid, per_anchor, 0.0))

    out_ref[...] = jnp.zeros((1, 8, 128), jnp.float32) + partial


def triplet_loss(label, source, target, margin=MARGIN):
    # `label` only feeds the unavailable triplet_selection path; not passed to the kernel.
    del label
    B, D = source.shape
    assert target.shape == (B, D)

    # Anchor tile: multiple of 8 sublanes, shrunk until the VMEM estimate fits the budget
    # (re-derived for v7x's 64 MiB physical / 32 MiB scoped default).
    tile_b = min(128, _round_up(B, 8))
    while tile_b > 8 and _vmem_estimate(tile_b, B, D) > _VMEM_BUDGET:
        tile_b = max(8, _round_up(tile_b // 2, 8))
    b_pad = _round_up(B, tile_b)
    num_tiles = b_pad // tile_b

    src = source
    if b_pad != B:
        src = jnp.zeros((b_pad, D), source.dtype).at[:B].set(source)

    # Bounded unroll: full unroll only for tiny B, otherwise 8 (kept a divisor of B).
    if B <= 16:
        unroll = max(B, 1)
    else:
        unroll = next(u for u in (8, 4, 2, 1) if B % u == 0)

    kernel = functools.partial(_triplet_loss_kernel, margin=float(margin),
                               batch_b=B, tile_b=tile_b, unroll=unroll)
    vmem_limit = int(min(max(_vmem_estimate(tile_b, B, D), 32 << 20), 64 << 20))

    partials = pl.pallas_call(
        kernel,
        out_shape=jax.ShapeDtypeStruct((num_tiles, 8, 128), jnp.float32),
        grid=(num_tiles,),
        in_specs=[
            pl.BlockSpec((tile_b, D), lambda i: (i, 0)),   # anchor tile
            pl.BlockSpec((B, D), lambda i: (0, 0)),        # full target, resident
        ],
        out_specs=pl.BlockSpec((1, 8, 128), lambda i: (i, 0, 0)),   # per-tile partial sums
        scratch_shapes=[pltpu.VMEM((B, tile_b), jnp.float32)],      # fdT for per-k row reads
        compiler_params=pltpu.CompilerParams(
            dimension_semantics=("parallel",),
            vmem_limit_bytes=vmem_limit),
    )(src, target)

    total = jnp.sum(partials[:, 0, 0])
    num_pos = float(B * (B - 1) * (B - 2))   # static count of distinct ordered triplets
    return total / (num_pos + 1e-16)


def _reference(label, source, target, margin=MARGIN):
    # Pure-JAX reference of the same semantics (base distinct-triplet mask only).
    del label
    sn = jnp.maximum(jnp.linalg.norm(source, axis=-1, keepdims=True), _COS_EPS)
    tn = jnp.maximum(jnp.linalg.norm(target, axis=-1, keepdims=True), _COS_EPS)
    fd = jnp.maximum(1.0 - (source / sn) @ (target / tn).T, 0.0)
    B = source.shape[0]
    i, j, k = jnp.meshgrid(jnp.arange(B), jnp.arange(B), jnp.arange(B), indexing="ij")
    mask = (i != j) & (i != k) & (j != k)
    tl = fd[:, :, None] - fd[:, None, :] + margin
    tl = jnp.maximum(jnp.where(mask, tl, 0.0), 0.0)
    return jnp.sum(tl) / (jnp.sum(mask.astype(jnp.float32)) + 1e-16)


if __name__ == "__main__":
    B, D, C = 8, 32, 8
    key = jax.random.PRNGKey(0)
    k1, k2, k3 = jax.random.split(key, 3)
    source = jax.random.normal(k1, (B, D), dtype=jnp.float32)
    target = jax.random.normal(k2, (B, D), dtype=jnp.float32)
    label = jax.nn.one_hot(jax.random.randint(k3, (B,), 0, C), C, dtype=jnp.float32)

    loss = triplet_loss(label, source, target)
    loss = jax.block_until_ready(loss)

    ref = _reference(label, source, target)
    assert jnp.allclose(loss, ref, rtol=2e-4, atol=1e-5), (loss, ref)
    print("KERNEL_OK")
</pallas_src>

<mosaic_0001>
module attributes {stable_mosaic.version = 11 : i64} {
  func.func @_triplet_loss_kernel(%arg0: i32, %arg1: memref<8x32xf32, #tpu.memory_space<vmem>>, %arg2: memref<8x32xf32, #tpu.memory_space<vmem>>, %arg3: memref<1x8x128xf32, #tpu.memory_space<vmem>>, %arg4: memref<8x8xf32, #tpu.memory_space<vmem>>) attributes {dimension_semantics = [#tpu.dimension_semantics<parallel>], iteration_bounds = array<i64: 1>, scalar_prefetch = 0 : i64, scratch_operands = 1 : i64, tpu.core_type = #tpu.core_type<tc>, window_params = [{transform_indices = @transform_0, window_bounds = array<i64: 8, 32>}, {pipeline_mode = #tpu.pipeline_mode<synchronous>, transform_indices = @transform_1, window_bounds = array<i64: 8, 32>}, {transform_indices = @transform_2, window_bounds = array<i64: 1, 8, 128>}]} {
    %c0 = arith.constant 0 : index
    %c0_0 = arith.constant 0 : index
    %0 = vector.load %arg1[%c0, %c0_0] : memref<8x32xf32, #tpu.memory_space<vmem>>, vector<8x32xf32>
    %c0_1 = arith.constant 0 : index
    %c0_2 = arith.constant 0 : index
    %1 = vector.load %arg2[%c0_1, %c0_2] : memref<8x32xf32, #tpu.memory_space<vmem>>, vector<8x32xf32>
    %2 = arith.mulf %0, %0 : vector<8x32xf32>
    %cst = arith.constant dense<0.000000e+00> : vector<8xf32>
    %3 = vector.multi_reduction <add>, %2, %cst [1] : vector<8x32xf32> to vector<8xf32>
    %4 = vector.shape_cast %3 : vector<8xf32> to vector<8x1xf32>
    %5 = math.rsqrt %4 : vector<8x1xf32>
    %cst_3 = arith.constant 1.000000e+08 : f32
    %6 = vector.broadcast %cst_3 : f32 to vector<8x1xf32>
    %7 = arith.minimumf %5, %6 : vector<8x1xf32>
    %8 = arith.mulf %1, %1 : vector<8x32xf32>
    %cst_4 = arith.constant dense<0.000000e+00> : vector<8xf32>
    %9 = vector.multi_reduction <add>, %8, %cst_4 [1] : vector<8x32xf32> to vector<8xf32>
    %10 = vector.shape_cast %9 : vector<8xf32> to vector<8x1xf32>
    %11 = math.rsqrt %10 : vector<8x1xf32>
    %cst_5 = arith.constant 1.000000e+08 : f32
    %12 = vector.broadcast %cst_5 : f32 to vector<8x1xf32>
    %13 = arith.minimumf %11, %12 : vector<8x1xf32>
    %14 = vector.broadcast %13 : vector<8x1xf32> to vector<8x32xf32>
    %15 = arith.mulf %1, %14 : vector<8x32xf32>
    %16 = vector.broadcast %7 : vector<8x1xf32> to vector<8x32xf32>
    %17 = arith.mulf %0, %16 : vector<8x32xf32>
    %cst_6 = arith.constant dense<0.000000e+00> : vector<8x8xf32>
    %18 = tpu.matmul %15, %17, %cst_6 {dimension_numbers = #tpu.dot_dimension_numbers<[1], [1], [0], [0], [0, 0, 1, 0], [], []>} : vector<8x32xf32>, vector<8x32xf32>, vector<8x8xf32> -> vector<8x8xf32>
    %cst_7 = arith.constant 1.000000e+00 : f32
    %19 = vector.broadcast %cst_7 : f32 to vector<8x8xf32>
    %20 = arith.subf %19, %18 : vector<8x8xf32>
    %cst_8 = arith.constant 0.000000e+00 : f32
    %21 = vector.broadcast %cst_8 : f32 to vector<8x8xf32>
    %22 = arith.maximumf %20, %21 : vector<8x8xf32>
    %c0_9 = arith.constant 0 : index
    %c0_10 = arith.constant 0 : index
    %23 = vector.load %arg4[%c0_9, %c0_10] : memref<8x8xf32, #tpu.memory_space<vmem>>, vector<8x8xf32>
    tpu.vector_store %arg4[%c0_9, %c0_10], %22 {strides = array<i32>} : memref<8x8xf32, #tpu.memory_space<vmem>>, vector<8x8xf32>,
    %c8_i32 = arith.constant 8 : i32
    %24 = arith.muli %arg0, %c8_i32 : i32
    %cst_11 = arith.constant 2.000000e-01 : f32
    %25 = vector.broadcast %cst_11 : f32 to vector<8x8xf32>
    %26 = arith.addf %22, %25 : vector<8x8xf32>
    %cst_12 = arith.constant 0.000000e+00 : f32
    %27 = vector.broadcast %cst_12 : f32 to vector<8x8xf32>
    %c0_i32 = arith.constant 0 : i32
    %28 = arith.index_cast %c0_i32 : i32 to index
    %c0_13 = arith.constant 0 : index
    %29 = vector.load %arg4[%28, %c0_13] : memref<8x8xf32, #tpu.memory_space<vmem>>, vector<1x8xf32>
    %30 = vector.broadcast %29 : vector<1x8xf32> to vector<8x8xf32>
    %31 = arith.subf %26, %30 : vector<8x8xf32>
    %cst_14 = arith.constant 0.000000e+00 : f32
    %32 = vector.broadcast %cst_14 : f32 to vector<8x8xf32>
    %33 = arith.maximumf %31, %32 : vector<8x8xf32>
    %34 = arith.addf %27, %33 : vector<8x8xf32>
    %c1_i32 = arith.constant 1 : i32
    %35 = arith.index_cast %c1_i32 : i32 to index
    %c0_15 = arith.constant 0 : index
    %36 = vector.load %arg4[%35, %c0_15] : memref<8x8xf32, #tpu.memory_space<vmem>>, vector<1x8xf32>
    %37 = vector.broadcast %36 : vector<1x8xf32> to vector<8x8xf32>
    %38 = arith.subf %26, %37 : vector<8x8xf32>
    %cst_16 = arith.constant 0.000000e+00 : f32
    %39 = vector.broadcast %cst_16 : f32 to vector<8x8xf32>
    %40 = arith.maximumf %38, %39 : vector<8x8xf32>
    %41 = arith.addf %34, %40 : vector<8x8xf32>
    %c2_i32 = arith.constant 2 : i32
    %42 = arith.index_cast %c2_i32 : i32 to index
    %c0_17 = arith.constant 0 : index
    %43 = vector.load %arg4[%42, %c0_17] : memref<8x8xf32, #tpu.memory_space<vmem>>, vector<1x8xf32>
    %44 = vector.broadcast %43 : vector<1x8xf32> to vector<8x8xf32>
    %45 = arith.subf %26, %44 : vector<8x8xf32>
    %cst_18 = arith.constant 0.000000e+00 : f32
    %46 = vector.broadcast %cst_18 : f32 to vector<8x8xf32>
    %47 = arith.maximumf %45, %46 : vector<8x8xf32>
    %48 = arith.addf %41, %47 : vector<8x8xf32>
    %c3_i32 = arith.constant 3 : i32
    %49 = arith.index_cast %c3_i32 : i32 to index
    %c0_19 = arith.constant 0 : index
    %50 = vector.load %arg4[%49, %c0_19] : memref<8x8xf32, #tpu.memory_space<vmem>>, vector<1x8xf32>
    %51 = vector.broadcast %50 : vector<1x8xf32> to vector<8x8xf32>
    %52 = arith.subf %26, %51 : vector<8x8xf32>
    %cst_20 = arith.constant 0.000000e+00 : f32
    %53 = vector.broadcast %cst_20 : f32 to vector<8x8xf32>
    %54 = arith.maximumf %52, %53 : vector<8x8xf32>
    %55 = arith.addf %48, %54 : vector<8x8xf32>
    %c4_i32 = arith.constant 4 : i32
    %56 = arith.index_cast %c4_i32 : i32 to index
    %c0_21 = arith.constant 0 : index
    %57 = vector.load %arg4[%56, %c0_21] : memref<8x8xf32, #tpu.memory_space<vmem>>, vector<1x8xf32>
    %58 = vector.broadcast %57 : vector<1x8xf32> to vector<8x8xf32>
    %59 = arith.subf %26, %58 : vector<8x8xf32>
    %cst_22 = arith.constant 0.000000e+00 : f32
    %60 = vector.broadcast %cst_22 : f32 to vector<8x8xf32>
    %61 = arith.maximumf %59, %60 : vector<8x8xf32>
    %62 = arith.addf %55, %61 : vector<8x8xf32>
    %c5_i32 = arith.constant 5 : i32
    %63 = arith.index_cast %c5_i32 : i32 to index
    %c0_23 = arith.constant 0 : index
    %64 = vector.load %arg4[%63, %c0_23] : memref<8x8xf32, #tpu.memory_space<vmem>>, vector<1x8xf32>
    %65 = vector.broadcast %64 : vector<1x8xf32> to vector<8x8xf32>
    %66 = arith.subf %26, %65 : vector<8x8xf32>
    %cst_24 = arith.constant 0.000000e+00 : f32
    %67 = vector.broadcast %cst_24 : f32 to vector<8x8xf32>
    %68 = arith.maximumf %66, %67 : vector<8x8xf32>
    %69 = arith.addf %62, %68 : vector<8x8xf32>
    %c6_i32 = arith.constant 6 : i32
    %70 = arith.index_cast %c6_i32 : i32 to index
    %c0_25 = arith.constant 0 : index
    %71 = vector.load %arg4[%70, %c0_25] : memref<8x8xf32, #tpu.memory_space<vmem>>, vector<1x8xf32>
    %72 = vector.broadcast %71 : vector<1x8xf32> to vector<8x8xf32>
    %73 = arith.subf %26, %72 : vector<8x8xf32>
    %cst_26 = arith.constant 0.000000e+00 : f32
    %74 = vector.broadcast %cst_26 : f32 to vector<8x8xf32>
    %75 = arith.maximumf %73, %74 : vector<8x8xf32>
    %76 = arith.addf %69, %75 : vector<8x8xf32>
    %c7_i32 = arith.constant 7 : i32
    %77 = arith.index_cast %c7_i32 : i32 to index
    %c0_27 = arith.constant 0 : index
    %78 = vector.load %arg4[%77, %c0_27] : memref<8x8xf32, #tpu.memory_space<vmem>>, vector<1x8xf32>
    %79 = vector.broadcast %78 : vector<1x8xf32> to vector<8x8xf32>
    %80 = arith.subf %26, %79 : vector<8x8xf32>
    %cst_28 = arith.constant 0.000000e+00 : f32
    %81 = vector.broadcast %cst_28 : f32 to vector<8x8xf32>
    %82 = arith.maximumf %80, %81 : vector<8x8xf32>
    %83 = arith.addf %76, %82 : vector<8x8xf32>
    %c8_i32_29 = arith.constant 8 : i32
    %cst_30 = arith.constant dense<0.000000e+00> : vector<8xf32>
    %84 = vector.multi_reduction <add>, %83, %cst_30 [0] : vector<8x8xf32> to vector<8xf32>
    %85 = vector.shape_cast %84 : vector<8xf32> to vector<1x8xf32>
    %86 = tpu.iota {dimensions = array<i32: 0>} : vector<8x8xi32>
    %87 = tpu.iota {dimensions = array<i32: 1>} : vector<8x8xi32>
    %88 = vector.broadcast %24 : i32 to vector<8x8xi32>
    %89 = arith.addi %87, %88 : vector<8x8xi32>
    %90 = arith.cmpi eq, %86, %89 : vector<8x8xi32>
    %cst_31 = arith.constant 0.000000e+00 : f32
    %91 = vector.broadcast %cst_31 : f32 to vector<8x8xf32>
    %92 = arith.select %90, %22, %91 : vector<8x8xi1>, vector<8x8xf32>
    %cst_32 = arith.constant dense<0.000000e+00> : vector<8xf32>
    %93 = vector.multi_reduction <add>, %92, %cst_32 [0] : vector<8x8xf32> to vector<8xf32>
    %94 = vector.shape_cast %93 : vector<8xf32> to vector<1x8xf32>
    %95 = vector.broadcast %94 : vector<1x8xf32> to vector<8x8xf32>
    %96 = arith.subf %95, %22 : vector<8x8xf32>
    %cst_33 = arith.constant 2.000000e-01 : f32
    %97 = vector.broadcast %cst_33 : f32 to vector<8x8xf32>
    %98 = arith.addf %96, %97 : vector<8x8xf32>
    %cst_34 = arith.constant 0.000000e+00 : f32
    %99 = vector.broadcast %cst_34 : f32 to vector<8x8xf32>
    %100 = arith.maximumf %98, %99 : vector<8x8xf32>
    %cst_35 = arith.constant dense<0.000000e+00> : vector<8xf32>
    %101 = vector.multi_reduction <add>, %100, %cst_35 [0] : vector<8x8xf32> to vector<8xf32>
    %102 = vector.shape_cast %101 : vector<8xf32> to vector<1x8xf32>
    %103 = vector.broadcast %94 : vector<1x8xf32> to vector<8x8xf32>
    %104 = arith.subf %22, %103 : vector<8x8xf32>
    %cst_36 = arith.constant 2.000000e-01 : f32
    %105 = vector.broadcast %cst_36 : f32 to vector<8x8xf32>
    %106 = arith.addf %104, %105 : vector<8x8xf32>
    %cst_37 = arith.constant 0.000000e+00 : f32
    %107 = vector.broadcast %cst_37 : f32 to vector<8x8xf32>
    %108 = arith.maximumf %106, %107 : vector<8x8xf32>
    %cst_38 = arith.constant dense<0.000000e+00> : vector<8xf32>
    %109 = vector.multi_reduction <add>, %108, %cst_38 [0] : vector<8x8xf32> to vector<8xf32>
    %110 = vector.shape_cast %109 : vector<8xf32> to vector<1x8xf32>
    %111 = arith.subf %85, %102 : vector<1x8xf32>
    %112 = arith.subf %111, %110 : vector<1x8xf32>
    %cst_39 = arith.constant -1.200000e+00 : f32
    %113 = vector.broadcast %cst_39 : f32 to vector<1x8xf32>
    %114 = arith.addf %112, %113 : vector<1x8xf32>
    %115 = tpu.iota {dimensions = array<i32: 1>} : vector<1x8xi32>
    %116 = vector.broadcast %24 : i32 to vector<1x8xi32>
    %117 = arith.addi %115, %116 : vector<1x8xi32>
    %c8_i32_40 = arith.constant 8 : i32
    %118 = vector.broadcast %c8_i32_40 : i32 to vector<1x8xi32>
    %119 = arith.cmpi slt, %117, %118 : vector<1x8xi32>
    %cst_41 = arith.constant 0.000000e+00 : f32
    %120 = vector.broadcast %cst_41 : f32 to vector<1x8xf32>
    %121 = arith.select %119, %114, %120 : vector<1x8xi1>, vector<1x8xf32>
    %122 = vector.shape_cast %121 : vector<1x8xf32> to vector<1x1x8xf32>
    %cst_42 = arith.constant dense<0.000000e+00> : vector<1xf32>
    %123 = vector.multi_reduction <add>, %122, %cst_42 [1, 2] : vector<1x1x8xf32> to vector<1xf32>
    %124 = vector.shape_cast %123 : vector<1xf32> to vector<1x1x1xf32>
    %125 = vector.extract %124[0, 0, 0] : f32 from vector<1x1x1xf32>
    %cst_43 = arith.constant 0.000000e+00 : f32
    %126 = vector.broadcast %cst_43 : f32 to vector<1x8x128xf32>
    %127 = vector.broadcast %125 : f32 to vector<1x8x128xf32>
    %128 = arith.addf %126, %127 : vector<1x8x128xf32>
    %c0_44 = arith.constant 0 : index
    %c0_45 = arith.constant 0 : index
    %c0_46 = arith.constant 0 : index
    %129 = vector.load %arg3[%c0_44, %c0_45, %c0_46] : memref<1x8x128xf32, #tpu.memory_space<vmem>>, vector<1x8x128xf32>
    tpu.vector_store %arg3[%c0_44, %c0_45, %c0_46], %128 {strides = array<i32>} : memref<1x8x128xf32, #tpu.memory_space<vmem>>, vector<1x8x128xf32>,
    return
  }
  func.func @transform_0(%arg0: i32) -> (i32, i32) {
    %c0_i32 = arith.constant 0 : i32
    %c0_i32_0 = arith.constant 0 : i32
    return %arg0, %c0_i32 : i32, i32
  }
  func.func @transform_1(%arg0: i32) -> (i32, i32) {
    %c0_i32 = arith.constant 0 : i32
    %c0_i32_0 = arith.constant 0 : i32
    %c0_i32_1 = arith.constant 0 : i32
    return %c0_i32, %c0_i32_0 : i32, i32
  }
  func.func @transform_2(%arg0: i32) -> (i32, i32, i32) {
    %c0_i32 = arith.constant 0 : i32
    %c0_i32_0 = arith.constant 0 : i32
    %c0_i32_1 = arith.constant 0 : i32
    return %arg0, %c0_i32, %c0_i32_0 : i32, i32, i32
  }
}

</mosaic_0001>

<llo_original>
// kernel: tpu_custom_call.1
$region0: #{tpu_custom_call.1}
  #allocation0 [shape = 'u32[]', space=smem, size = 0x4, offset = 0x4, fixed_abs, tag = 'smem constant byte address 0x4 - core index']
  #allocation1 [shape = 'u32[144,128]{1,0:T(1,128)}', space=vmem, size = 0x12000, scoped, tag = 'internal scratch']
  #allocation2 [shape = 'f32[8,8]{1,0:T(8,128)}', space=vmem, size = 0x1000, scoped, tag = 'scratch operand']
  %s0 = inlined_call_operand.hbm [shape: f32[8,32], index: 0, kind: input, shape index: {}]
  %s1 = inlined_call_operand.hbm [shape: f32[8,32], index: 1, kind: input, shape index: {}]
  %s2 = inlined_call_operand.hbm [shape: f32[1,8,128], index: 2, kind: output, shape index: {}]
  %s3 = sld [smem:[#allocation0]]
  $region26: #{tpu_custom_call.1} parent=0
    _
  %s5 = ssub.s32 1, %s3
  %s6 = scalar_select 0, %s5, %s3
  $region1: #{tpu_custom_call.1} parent=0
    #allocation3 [shape = 'u8[4096]{0}', space=vmem, size = 0x1000, scoped, tag = 'input window, operand 0, single buffered']
    #allocation4 [shape = 's32[1]{0}', space=sflag, size = 0x4, scoped, tag = 'scoped memory for tpu_custom_call.1']
    #allocation5 [shape = 's32[1]{0}', space=sflag, size = 0x4, scoped, tag = 'scoped memory for tpu_custom_call.1']
    #allocation6 [shape = 'u8[4096]{0}', space=vmem, size = 0x1000, scoped, tag = 'input window, operand 1, single buffered']
    #allocation7 [shape = 's32[1]{0}', space=sflag, size = 0x4, scoped, tag = 'scoped memory for tpu_custom_call.1']
    #allocation8 [shape = 'u8[4096]{0}', space=vmem, size = 0x1000, scoped, tag = 'output window, operand 0, single buffered']
    %7 = vsyncpa [#allocation4], 0
    %8 = vsyncpa [#allocation7], 0
    %9 = vsyncpa [#allocation5], 0
    // Predicated region
    $region2: #{tpu_custom_call.1} parent=1 // pred_check
      _
    $region3: #{tpu_custom_call.1} parent=1 // pred_check_branch
      %11 = sbr.rel (0) target = $region5
    $region4: #{tpu_custom_call.1} parent=1 // pred_region
      %s13 = ssub.s32 128, 128
      %14 = vsyncadd [#allocation4], %s13
      %s16 = sshll.u32 [#allocation3], 4
      %s17 = int_to_ptr.vmem [resolvable:$true] %s16
      %19 = dma.hbm_to_vmem [thread:$0]  %s0, 128, %s17, [#allocation4]
    $region5: #{tpu_custom_call.1} parent=1 // pred_fallthru
      _
    // Predicated region
    $region6: #{tpu_custom_call.1} parent=1 // pred_check
      _
    $region7: #{tpu_custom_call.1} parent=1 // pred_check_branch
      %21 = sbr.rel (0) target = $region9
    $region8: #{tpu_custom_call.1} parent=1 // pred_region
      %s23 = ssub.s32 128, 128
      %24 = vsyncadd [#allocation7], %s23
      %s26 = sshll.u32 [#allocation6], 4
      %s27 = int_to_ptr.vmem [resolvable:$true] %s26
      %29 = dma.hbm_to_vmem [thread:$0]  %s1, 128, %s27, [#allocation7]
    $region9: #{tpu_custom_call.1} parent=1 // pred_fallthru
      _
    // Predicated region
    $region10: #{tpu_custom_call.1} parent=1 // pred_check
      _
    $region11: #{tpu_custom_call.1} parent=1 // pred_check_branch
      %31 = sbr.rel (0) target = $region13
    $region12: #{tpu_custom_call.1} parent=1 // pred_region
      %32 = dma.done [#allocation4], 128
    $region13: #{tpu_custom_call.1} parent=1 // pred_fallthru
      _
    // Predicated region
    $region14: #{tpu_custom_call.1} parent=1 // pred_check
      _
    $region15: #{tpu_custom_call.1} parent=1 // pred_check_branch
      %34 = sbr.rel (0) target = $region17
    $region16: #{tpu_custom_call.1} parent=1 // pred_region
      %35 = dma.done [#allocation7], 128
    $region17: #{tpu_custom_call.1} parent=1 // pred_fallthru
      _
    %v36 = vld [vmem:[#allocation3] sm:$0xff]
    %v37 = vld [vmem:[#allocation6] sm:$0xff]
    %v38 = vmul.f32 %v36, %v36
    %vm39 = vcmask 261120
    %v40 = vsel %vm39, %v38, 0.0
    %41 = vadd.xlane.f32.xlu0 %v40
    %v42 = vpop.xlane.xlu0 %41
    %v43 = vrsqrt.pop %v42
    %v44 = vmin.f32 %v43, 1e+08
    %v45 = vmul.f32 %v37, %v37
    %v46 = vsel %vm39, %v45, 0.0
    %47 = vadd.xlane.f32.xlu0 %v46
    %v48 = vpop.xlane.xlu0 %47
    %v49 = vrsqrt.pop %v48
    %v50 = vmin.f32 %v49, 1e+08
    %v51 = vmul.f32 %v37, %v50
    %v52 = vmul.f32 %v36, %v44
    %v54 = vsel %vm39, %v51, 0
    %v57 = vsel %vm39, %v52, 0
    %59 = vmatprep.subr.mxu0 0.0
    %60 = vmatpush1.xpose.msra.mxu0 %v57
    %61 = vmatprep.subr.mxu0 0.0
    %62 = vmatpush1.xpose.msra.mxu0 0.0
    %63 = vmatprep.subr.mxu0 0.0
    %64 = vmatpush1.xpose.msra.mxu0 0.0
    %65 = vmatprep.subr.mxu0 0.0
    %66 = vmatpush1.xpose.msra.mxu0 0.0
    %67 = vmatprep.subr.mxu0 0.0
    %68 = vmatpush1.xpose.msra.mxu0 0.0
    %69 = vmatprep.subr.mxu0 0.0
    %70 = vmatpush1.xpose.msra.mxu0 0.0
    %71 = vmatprep.subr.mxu0 0.0
    %72 = vmatpush1.xpose.msra.mxu0 0.0
    %73 = vmatprep.subr.mxu0 0.0
    %74 = vmatpush1.xpose.msra.mxu0 0.0
    %75 = vmatprep.subr.mxu0 0.0
    %76 = vmatpush1.xpose.msra.mxu0 0.0
    %77 = vmatprep.subr.mxu0 0.0
    %78 = vmatpush1.xpose.msra.mxu0 0.0
    %79 = vmatprep.subr.mxu0 0.0
    %80 = vmatpush1.xpose.msra.mxu0 0.0
    %81 = vmatprep.subr.mxu0 0.0
    %82 = vmatpush1.xpose.msra.mxu0 0.0
    %83 = vmatprep.subr.mxu0 0.0
    %84 = vmatpush1.xpose.msra.mxu0 0.0
    %85 = vmatprep.subr.mxu0 0.0
    %86 = vmatpush1.xpose.msra.mxu0 0.0
    %87 = vmatprep.subr.mxu0 0.0
    %88 = vmatpush1.xpose.msra.mxu0 0.0
    %89 = vmatprep.subr.mxu0 0.0
    %90 = vmatpush1.xpose.msra.mxu0 0.0
    %91 = vmatprep.subr.mxu0 0.0
    %92 = vmatpush1.xpose.msra.mxu0 0.0
    %93 = vmatprep.subr.mxu0 0.0
    %94 = vmatpush1.xpose.msra.mxu0 0.0
    %95 = vmatprep.subr.mxu0 0.0
    %96 = vmatpush1.xpose.msra.mxu0 0.0
    %97 = vmatprep.subr.mxu0 0.0
    %98 = vmatpush1.xpose.msra.mxu0 0.0
    %99 = vmatprep.subr.mxu0 0.0
    %100 = vmatpush1.xpose.msra.mxu0 0.0
    %101 = vmatprep.subr.mxu0 0.0
    %102 = vmatpush1.xpose.msra.mxu0 0.0
    %103 = vmatprep.subr.mxu0 0.0
    %104 = vmatpush1.xpose.msra.mxu0 0.0
    %105 = vmatprep.subr.mxu0 0.0
    %106 = vmatpush1.xpose.msra.mxu0 0.0
    %107 = vmatprep.subr.mxu0 0.0
    %108 = vmatpush1.xpose.msra.mxu0 0.0
    %109 = vmatprep.subr.mxu0 0.0
    %110 = vmatpush1.xpose.msra.mxu0 0.0
    %111 = vmatprep.subr.mxu0 0.0
    %112 = vmatpush1.xpose.msra.mxu0 0.0
    %113 = vmatprep.subr.mxu0 0.0
    %114 = vmatpush1.xpose.msra.mxu0 0.0
    %115 = vmatprep.subr.mxu0 0.0
    %116 = vmatpush1.xpose.msra.mxu0 0.0
    %117 = vmatprep.subr.mxu0 0.0
    %118 = vmatpush1.xpose.msra.mxu0 0.0
    %119 = vmatprep.subr.mxu0 0.0
    %120 = vmatpush1.xpose.msra.mxu0 0.0
    %121 = vmatprep.subr.mxu0 0.0
    %122 = vmatpush1.xpose.msra.mxu0 0.0
    %123 = vmatprep.mubr.f32.mxu0 0.0
    %124 = vmatmul.mubr.f32.gmra.mrb[0].mxu0 %v54
    %v125 = vpop.f32.mrb[0].mxu0
    %v126 = vadd.f32 0.0, %v125
    %v127 = vpop.f32.mrb[0].mxu0
    %128 = vdwg.mxu0
    %v129 = vsub.f32 1.0, %v126
    %v130 = vmax.f32 %v129, 0.0
    %vm131 = vcmask 64512
    %132 = vst.msk [vmem:[#allocation2] sm:$0xff] %vm131, %v130
    %s133 = smul.u32 0, 8
    %v134 = vadd.f32 %v130, 0.2
    %v135 = vld [vmem:[#allocation2] sm:$0x1]
    %v136 = vlaneseq
    %v137 = vshrl.u32 %v136, 7
    %v138 = vsub.s32 0, %v137
    %v139 = vrot.slane %v135, %v138
    %v140 = vsub.f32 %v134, %v139
    %v141 = vmax.f32 %v140, 0.0
    %v142 = vadd.f32 %v141, 0.0
    %v143 = vld [vmem:[#allocation2 + $0x1] sm:$0x1]
    %v144 = vlaneseq
    %v145 = vshrl.u32 %v144, 7
    %v146 = vsub.s32 0, %v145
    %v147 = vrot.slane %v143, %v146
    %v148 = vsub.f32 %v134, %v147
    %v149 = vmax.f32 %v148, 0.0
    %v150 = vadd.f32 %v142, %v149
    %v151 = vld [vmem:[#allocation2 + $0x2] sm:$0x1]
    %v152 = vlaneseq
    %v153 = vshrl.u32 %v152, 7
    %v154 = vsub.s32 0, %v153
    %v155 = vrot.slane %v151, %v154
    %v156 = vsub.f32 %v134, %v155
    %v157 = vmax.f32 %v156, 0.0
    %v158 = vadd.f32 %v150, %v157
    %v159 = vld [vmem:[#allocation2 + $0x3] sm:$0x1]
    %v160 = vlaneseq
    %v161 = vshrl.u32 %v160, 7
    %v162 = vsub.s32 0, %v161
    %v163 = vrot.slane %v159, %v162
    %v164 = vsub.f32 %v134, %v163
    %v165 = vmax.f32 %v164, 0.0
    %v166 = vadd.f32 %v158, %v165
    %v167 = vld [vmem:[#allocation2 + $0x4] sm:$0x1]
    %v168 = vlaneseq
    %v169 = vshrl.u32 %v168, 7
    %v170 = vsub.s32 0, %v169
    %v171 = vrot.slane %v167, %v170
    %v172 = vsub.f32 %v134, %v171
    %v173 = vmax.f32 %v172, 0.0
    %v174 = vadd.f32 %v166, %v173
    %v175 = vld [vmem:[#allocation2 + $0x5] sm:$0x1]
    %v176 = vlaneseq
    %v177 = vshrl.u32 %v176, 7
    %v178 = vsub.s32 0, %v177
    %v179 = vrot.slane %v175, %v178
    %v180 = vsub.f32 %v134, %v179
    %v181 = vmax.f32 %v180, 0.0
    %v182 = vadd.f32 %v174, %v181
    %v183 = vld [vmem:[#allocation2 + $0x6] sm:$0x1]
    %v184 = vlaneseq
    %v185 = vshrl.u32 %v184, 7
    %v186 = vsub.s32 0, %v185
    %v187 = vrot.slane %v183, %v186
    %v188 = vsub.f32 %v134, %v187
    %v189 = vmax.f32 %v188, 0.0
    %v190 = vadd.f32 %v182, %v189
    %v191 = vld [vmem:[#allocation2 + $0x7] sm:$0x1]
    %v192 = vlaneseq
    %v193 = vshrl.u32 %v192, 7
    %v194 = vsub.s32 0, %v193
    %v195 = vrot.slane %v191, %v194
    %v196 = vsub.f32 %v134, %v195
    %v197 = vmax.f32 %v196, 0.0
    %v198 = vadd.f32 %v190, %v197
    %v199 = vsel %vm131, %v198, 0.0
    %v200 = vrot.slane %v199, 4
    %v201 = vadd.f32 %v199, %v200
    %v202 = vrot.slane %v201, 2
    %v203 = vadd.f32 %v201, %v202
    %v204 = vrot.slane %v203, 1
    %v205 = vadd.f32 %v203, %v204
    %v206 = vlaneseq
    %v207 = vshrl.u32 %v206, 7
    %v208 = vlaneseq
    %v209 = vand.u32 %v208, 127
    %v210 = vstv %s133
    %v211 = vadd.s32 %v209, %v210
    %vm212 = vcmp.eq.s32.totalorder %v207, %v211
    %v213 = vsel %vm212, %v130, 0.0
    %v214 = vsel %vm131, %v213, 0.0
    %v215 = vrot.slane %v214, 4
    %v216 = vadd.f32 %v214, %v215
    %v217 = vrot.slane %v216, 2
    %v218 = vadd.f32 %v216, %v217
    %v219 = vrot.slane %v218, 1
    %v220 = vadd.f32 %v218, %v219
    %v221 = vsub.f32 %v220, %v130
    %v222 = vadd.f32 %v221, 0.2
    %v223 = vmax.f32 %v222, 0.0
    %v224 = vsel %vm131, %v223, 0.0
    %v225 = vrot.slane %v224, 4
    %v226 = vadd.f32 %v224, %v225
    %v227 = vrot.slane %v226, 2
    %v228 = vadd.f32 %v226, %v227
    %v229 = vrot.slane %v228, 1
    %v230 = vadd.f32 %v228, %v229
    %v231 = vsub.f32 %v130, %v220
    %v232 = vadd.f32 %v231, 0.2
    %v233 = vmax.f32 %v232, 0.0
    %v234 = vsel %vm131, %v233, 0.0
    %v235 = vrot.slane %v234, 4
    %v236 = vadd.f32 %v234, %v235
    %v237 = vrot.slane %v236, 2
    %v238 = vadd.f32 %v236, %v237
    %v239 = vrot.slane %v238, 1
    %v240 = vadd.f32 %v238, %v239
    %v241 = vsub.f32 %v205, %v230
    %v242 = vsub.f32 %v241, %v240
    %v243 = vadd.f32 %v242, -1.2
    %vm244 = vcmp.lt.s32.totalorder %v211, 8
    %v245 = vsel %vm244, %v243, 0.0
    %vm246 = vcmask 57344
    %v247 = vsel %vm246, %v245, 0.0
    %248 = vadd.xlane.f32.xlu0 %v247
    %v249 = vpop.xlane.xlu0 %248
    %v250 = vrot.slane %v249, 4
    %v251 = vadd.f32 %v249, %v250
    %v252 = vrot.slane %v251, 2
    %v253 = vadd.f32 %v251, %v252
    %v254 = vrot.slane %v253, 1
    %v255 = vadd.f32 %v253, %v254
    %s256 = vtos %v255
    %v257 = vstv %s256
    %v258 = vadd.f32 %v257, 0.0
    %259 = vst [vmem:[#allocation8] sm:$0xff] %v258
    // Predicated region
    $region18: #{tpu_custom_call.1} parent=1 // pred_check
      _
    $region19: #{tpu_custom_call.1} parent=1 // pred_check_branch
      %261 = sbr.rel (0) target = $region21
    $region20: #{tpu_custom_call.1} parent=1 // pred_region
      %s263 = ssub.s32 128, 128
      %264 = vsyncadd [#allocation5], %s263
      %s266 = sshll.u32 [#allocation8], 4
      %s267 = int_to_ptr.vmem [resolvable:$true] %s266
      %269 = dma.vmem_to_hbm [thread:$0]  %s267, 128, %s2, [#allocation5]
    $region21: #{tpu_custom_call.1} parent=1 // pred_fallthru
      _
    // Predicated region
    $region22: #{tpu_custom_call.1} parent=1 // pred_check
      _
    $region23: #{tpu_custom_call.1} parent=1 // pred_check_branch
      %271 = sbr.rel (0) target = $region25
    $region24: #{tpu_custom_call.1} parent=1 // pred_region
      %272 = dma.done [#allocation5], 128
    $region25: #{tpu_custom_call.1} parent=1 // pred_fallthru
      _
    %273 = vsyncpa [#allocation4], 1
    %274 = vsyncpa [#allocation7], 1
    %275 = vsyncpa [#allocation5], 1

</llo_original>
